<compile_context>
chip_gen: v7x
topology: tpu7x:2x2x1
jax: 0.10.0
libtpu: 0.0.40
codegen_flags: <defaults>
</compile_context>

<pallas_src>
from functools import partial

import jax
import jax.numpy as jnp
from jax.experimental import pallas as pl
from jax.experimental.pallas import tpu as pltpu

_EPS = 1e-5                        # nn.LayerNorm(eps=1e-05)
_INV_SQRT2 = 0.7071067811865476

# bf16 MXU operands + bf16 activation slabs (f32 accumulation / stats / GELU /
# softmax).  Set to jnp.float32 for closer parity with the f32 reference.
MATMUL_DTYPE = jnp.bfloat16
DECODE_DTYPE = MATMUL_DTYPE        # dtype of per-level decode slabs in HBM

_LANE = 128
_ROW_ALIGN = 16                    # sublane alignment, valid for f32 and bf16


# ----------------------------------------------------------------------------
# small helpers
# ----------------------------------------------------------------------------
def _round_up(x, m):
    return ((x + m - 1) // m) * m


def _tpu_row_defaults():
    """Per-generation row tile / scoped-VMEM limit.
    v5e/v6e have 128 MiB physical VMEM -> bigger tiles + ~96 MiB limit;
    v7x has 64 MiB -> smaller fusion tile + 48 MiB limit."""
    vmem = 64 * 1024 * 1024
    try:
        vmem = int(getattr(pltpu.get_tpu_info(), "vmem_capacity_bytes", vmem))
    except Exception:
        pass
    if vmem >= 100 * 1024 * 1024:                  # v5e / v6e
        return 1024, 96 * 1024 * 1024, 1024
    return 512, 48 * 1024 * 1024, 256              # v7x


_ROW_TILE, _VMEM_LIMIT, _FUSION_ROW_TILE = _tpu_row_defaults()


def _pick_row_tile(m, pref=None):
    pref = _ROW_TILE if pref is None else pref
    m = max(int(m), 1)
    if m <= _ROW_ALIGN:
        return _ROW_ALIGN
    # keep >= 2 grid steps so the "parallel" row axis can shard across v7x's
    # two TensorCores (harmless on 1-TC v5e/v6e).
    cap = _round_up((m + 1) // 2, _ROW_ALIGN)
    return max(_ROW_ALIGN, min(pref, cap))


def _pad_rows(x2d, tm):
    m = x2d.shape[0]
    mp = _round_up(m, tm)
    if mp != m:
        x2d = jnp.pad(x2d, ((0, mp - m), (0, 0)))
    return x2d, mp


def _park(shape):
    nd = len(shape)
    return pl.BlockSpec(shape, lambda i, _nd=nd: (0,) * _nd)   # grid-invariant


# ----------------------------------------------------------------------------
# elementwise helpers (kernel-side only: they use pl.reciprocal)
# ----------------------------------------------------------------------------
def _erf(x):
    # Abramowitz & Stegun 7.1.26 polynomial, |abs err| < 1.5e-7.
    a1, a2, a3, a4, a5 = (0.254829592, -0.284496736, 1.421413741,
                          -1.453152027, 1.061405429)
    p = 0.3275911
    s = jnp.where(x >= 0.0, 1.0, -1.0)
    z = jnp.abs(x)
    t = pl.reciprocal(1.0 + p * z, approx=True)          # EUP slot, frees VALU
    poly = ((((a5 * t + a4) * t + a3) * t + a2) * t + a1) * t
    return s * (1.0 - poly * jnp.exp(-z * z))


def _gelu_exact(x):
    # matches torch.nn.GELU() default (erf-based, approximate='none');
    # GELU(0) == 0 exactly, so zero-padded lanes stay exactly zero.
    return 0.5 * x * (1.0 + _erf(x * _INV_SQRT2))


def _layernorm_1p(x, gamma, beta, n_valid):
    """One-pass LayerNorm (E[x^2] - mean^2), f32 accumulation."""
    inv = 1.0 / n_valid
    s1 = jnp.sum(x, axis=-1, keepdims=True)
    s2 = jnp.sum(x * x, axis=-1, keepdims=True)
    mean = s1 * inv
    var = jnp.maximum(s2 * inv - mean * mean, 0.0)
    return (x - mean) * jax.lax.rsqrt(var + _EPS) * gamma + beta


def _masked_softmax(x, num_valid, log):
    """(log_)softmax over the last dim, ignoring lanes >= num_valid."""
    valid = None
    if num_valid < x.shape[-1]:
        lane = jax.lax.broadcasted_iota(jnp.int32, x.shape, x.ndim - 1)
        valid = lane < num_valid
        x = jnp.where(valid, x, -1e30)
    m = jnp.max(x, axis=-1, keepdims=True)
    z = x - m
    e = jnp.exp(z)
    if valid is not None:
        e = jnp.where(valid, e, 0.0)
    s = jnp.sum(e, axis=-1, keepdims=True)
    if log:
        return z - jnp.log(s)
    return e * pl.reciprocal(s, approx=True)


# ----------------------------------------------------------------------------
# Pallas kernels
# ----------------------------------------------------------------------------
def _proj_kernel(x_ref, g_ref, b_ref, w_ref, bias_ref, o_ref):
    """LayerNorm -> Linear -> GELU on a (tm, Cin) row tile (lane-dense out)."""
    x = x_ref[...].astype(jnp.float32)
    xn = _layernorm_1p(x, g_ref[...], b_ref[...], x.shape[-1])
    y = jnp.dot(xn.astype(w_ref.dtype), w_ref[...],
                preferred_element_type=jnp.float32) + bias_ref[...]
    o_ref[...] = _gelu_exact(y).astype(o_ref.dtype)


def _fusion_head_kernel(x1_ref, x2_ref, x3_ref, x4_ref,
                        g_ref, bt_ref, w1_ref, b1_ref, w2_ref, b2_ref,
                        o_ref, *, softmax_mode, num_valid, c_true):
    """fusion (LN -> Linear -> GELU) + 1x1-conv head (+ optional softmax).

    The four decode slabs form the *virtual* channel concat.  One-pass LN
    statistics are accumulated over the parts; the normalized parts are
    concatenated in VMEM and a single (tm, 4*E_pad) x (4*E_pad, Cp) matmul
    against the unsplit w1 feeds the GELU and the conv head.  Pad positions
    carry zero gamma/beta and zero weight rows, so they contribute nothing."""
    parts = [r[...].astype(jnp.float32) for r in (x1_ref, x2_ref, x3_ref, x4_ref)]
    inv_c = 1.0 / c_true

    s1 = sum(jnp.sum(p, axis=-1, keepdims=True) for p in parts)
    s2 = sum(jnp.sum(p * p, axis=-1, keepdims=True) for p in parts)
    mean = s1 * inv_c
    var = jnp.maximum(s2 * inv_c - mean * mean, 0.0)    # one-pass f32 variance
    rstd = jax.lax.rsqrt(var + _EPS)

    xcat = jnp.concatenate(parts, axis=-1)              # (tm, 4*E_pad), VMEM only
    xn = (xcat - mean) * rstd * g_ref[...] + bt_ref[...]
    h = _gelu_exact(jnp.dot(xn.astype(w1_ref.dtype), w1_ref[...],
                            preferred_element_type=jnp.float32) + b1_ref[...])
    logits = jnp.dot(h.astype(w2_ref.dtype), w2_ref[...],
                     preferred_element_type=jnp.float32) + b2_ref[...]
    if softmax_mode is None:
        o_ref[...] = logits.astype(o_ref.dtype)
    else:
        o_ref[...] = _masked_softmax(
            logits, num_valid, log=(softmax_mode == 'log')).astype(o_ref.dtype)


def _softmax_kernel(x_ref, o_ref, *, log, num_valid):
    o_ref[...] = _masked_softmax(x_ref[...].astype(jnp.float32), num_valid,
                                 log).astype(o_ref.dtype)


# ----------------------------------------------------------------------------
# pallas_call wrappers
# ----------------------------------------------------------------------------
def ln_linear_gelu(x2d, gamma, beta, w, bias):
    m, cin = x2d.shape
    cout = w.shape[1]
    cout_p = _round_up(cout, _LANE)            # lane-dense output (pads stay 0)
    tm = _pick_row_tile(m)
    xp, mp = _pad_rows(x2d, tm)

    wp = jnp.zeros((cin, cout_p), MATMUL_DTYPE).at[:, :cout].set(
        w.astype(MATMUL_DTYPE))
    bp = jnp.zeros((1, cout_p), jnp.float32).at[:, :cout].set(
        bias.reshape(1, cout))

    in_b = jnp.dtype(xp.dtype).itemsize
    cost = pl.CostEstimate(
        flops=2 * mp * cin * cout_p,
        transcendentals=mp * cout_p,
        bytes_accessed=mp * cin * in_b + cin * cout_p * 2
                       + mp * cout_p * jnp.dtype(DECODE_DTYPE).itemsize)

    out = pl.pallas_call(
        _proj_kernel,
        out_shape=jax.ShapeDtypeStruct((mp, cout_p), DECODE_DTYPE),
        grid=(mp // tm,),
        in_specs=[pl.BlockSpec((tm, cin), lambda i: (i, 0)),
                  _park((1, cin)), _park((1, cin)),
                  _park((cin, cout_p)), _park((1, cout_p))],
        out_specs=pl.BlockSpec((tm, cout_p), lambda i: (i, 0)),
        compiler_params=pltpu.CompilerParams(
            dimension_semantics=("parallel",),
            vmem_limit_bytes=_VMEM_LIMIT),
        cost_estimate=cost,
    )(xp, gamma.reshape(1, cin), beta.reshape(1, cin), wp, bp)
    # slice padded rows only; the channel padding (exact zeros) is carried
    # downstream so every store stays lane-dense.
    return out[:m]


def fusion_head(parts2d, gamma, beta, w1, b1, w2, b2, *, embed_dim, num_class,
                softmax_mode=None):
    assert len(parts2d) == 4
    m, e_pad = parts2d[0].shape
    e = embed_dim
    c = 4 * e
    cp = _round_up(c, _LANE)
    kp = _round_up(num_class, _LANE)
    tm = _pick_row_tile(m, pref=_FUSION_ROW_TILE)
    padded = [_pad_rows(p, tm)[0] for p in parts2d]
    mp = padded[0].shape[0]

    # parameters laid out on the *padded* virtual concat (4*e_pad channels);
    # pad positions carry zero gamma/beta/weight rows -> zero contribution.
    g_pad = jnp.zeros((4, e_pad), jnp.float32).at[:, :e].set(
        gamma.reshape(4, e)).reshape(1, 4 * e_pad)
    bt_pad = jnp.zeros((4, e_pad), jnp.float32).at[:, :e].set(
        beta.reshape(4, e)).reshape(1, 4 * e_pad)
    w1p = (jnp.zeros((4, e_pad, cp), MATMUL_DTYPE)
           .at[:, :e, :c].set(w1.reshape(4, e, c).astype(MATMUL_DTYPE))
           .reshape(4 * e_pad, cp))
    b1p = jnp.zeros((1, cp), jnp.float32).at[:, :c].set(b1.reshape(1, c))
    w2p = jnp.zeros((cp, kp), MATMUL_DTYPE).at[:c, :num_class].set(
        w2.astype(MATMUL_DTYPE))
    b2p = jnp.zeros((1, kp), jnp.float32).at[:, :num_class].set(
        b2.reshape(1, num_class))

    # bf16 logits when they feed the segSize resize; f32 for the final output.
    out_dtype = (jnp.float32 if (softmax_mode is not None
                                 or MATMUL_DTYPE == jnp.float32)
                 else DECODE_DTYPE)

    def row(width):
        return pl.BlockSpec((tm, width), lambda i: (i, 0))

    in_b = jnp.dtype(padded[0].dtype).itemsize
    cost = pl.CostEstimate(
        flops=2 * mp * (4 * e_pad * cp + cp * kp),
        transcendentals=mp * (cp + kp),
        bytes_accessed=4 * mp * e_pad * in_b + (4 * e_pad * cp + cp * kp) * 2
                       + mp * kp * jnp.dtype(out_dtype).itemsize)

    out = pl.pallas_call(
        partial(_fusion_head_kernel, softmax_mode=softmax_mode,
                num_valid=num_class, c_true=c),
        out_shape=jax.ShapeDtypeStruct((mp, kp), out_dtype),
        grid=(mp // tm,),
        in_specs=[row(e_pad), row(e_pad), row(e_pad), row(e_pad),
                  _park((1, 4 * e_pad)), _park((1, 4 * e_pad)),
                  _park((4 * e_pad, cp)), _park((1, cp)),
                  _park((cp, kp)), _park((1, kp))],
        out_specs=row(kp),
        compiler_params=pltpu.CompilerParams(
            dimension_semantics=("parallel",),
            vmem_limit_bytes=_VMEM_LIMIT),
        cost_estimate=cost,
    )(*padded, g_pad, bt_pad, w1p, b1p, w2p, b2p)
    return out[:m]


def channel_softmax(x2d, num_class, use_softmax):
    """(log_)softmax over the channel axis of a (rows, num_class) slab."""
    m, k = x2d.shape
    tm = _pick_row_tile(m)
    xp, mp = _pad_rows(x2d, tm)
    out_dtype = (DECODE_DTYPE if (use_softmax and MATMUL_DTYPE != jnp.float32)
                 else jnp.float32)
    out = pl.pallas_call(
        partial(_softmax_kernel, log=not use_softmax, num_valid=num_class),
        out_shape=jax.ShapeDtypeStruct((mp, k), out_dtype),
        grid=(mp // tm,),
        in_specs=[pl.BlockSpec((tm, k), lambda i: (i, 0))],
        out_specs=pl.BlockSpec((tm, k), lambda i: (i, 0)),
        compiler_params=pltpu.CompilerParams(
            dimension_semantics=("parallel",),
            vmem_limit_bytes=_VMEM_LIMIT),
    )(xp)
    return out[:m]


# ----------------------------------------------------------------------------
# bilinear resize (PyTorch align_corners=False) as two separable matmuls.
# TODO(synk): fuse the resize + softmax into a single Pallas kernel to remove
# the remaining HBM round trip of the segSize-resolution logits.
# ----------------------------------------------------------------------------
def _bilinear_matrix(in_size, out_size):
    i = jnp.arange(out_size, dtype=jnp.float32)
    src = (i + 0.5) * (in_size / out_size) - 0.5
    src = jnp.clip(src, 0.0, float(in_size - 1))
    lo = jnp.floor(src).astype(jnp.int32)
    hi = jnp.minimum(lo + 1, in_size - 1)
    w_hi = src - lo.astype(jnp.float32)
    w_lo = 1.0 - w_hi
    m = jnp.zeros((out_size, in_size), jnp.float32)
    m = m.at[jnp.arange(out_size), lo].add(w_lo)
    m = m.at[jnp.arange(out_size), hi].add(w_hi)
    return m


def _bilinear_resize_nhwc(x, out_hw):
    n, h, w, c = x.shape
    oh, ow = out_hw
    if (h, w) == (oh, ow):
        return x
    dt = x.dtype
    mh = _bilinear_matrix(h, oh).astype(dt)
    mw = _bilinear_matrix(w, ow).astype(dt)
    # explicit H pass then W pass: f32 accumulation, intermediates stored in
    # the input dtype (bf16 on the fast path) to halve HBM traffic.
    y = jnp.einsum('oh,nhwc->nowc', mh, x,
                   preferred_element_type=jnp.float32).astype(dt)
    y = jnp.einsum('pw,nowc->nopc', mw, y,
                   preferred_element_type=jnp.float32).astype(dt)
    return y


# ----------------------------------------------------------------------------
# parameters + forward
# ----------------------------------------------------------------------------
def init_params(key, embed_dim, num_class):
    dims = [embed_dim, embed_dim * 2, embed_dim * 4, embed_dim * 8]
    keys = iter(jax.random.split(key, 32))

    def nrm(shape, scale):
        return scale * jax.random.normal(next(keys), shape, jnp.float32)

    params = {}
    for idx, d in enumerate(dims, 1):
        params[f'proj{idx}'] = dict(
            gamma=1.0 + nrm((d,), 0.1), beta=nrm((d,), 0.1),
            w=nrm((d, embed_dim), 0.05), b=nrm((embed_dim,), 0.1))
    c = embed_dim * 4
    params['fusion'] = dict(gamma=1.0 + nrm((c,), 0.1), beta=nrm((c,), 0.1),
                            w=nrm((c, c), 0.05), b=nrm((c,), 0.1))
    params['conv_last'] = dict(w=nrm((c, num_class), 0.05),
                               b=nrm((num_class,), 0.1))
    return params


def ssformer_decoder_forward(params, feats_nchw, seg_size, embed_dim, num_class,
                             use_softmax=False):
    """head='SSSR'. Inputs NCHW (PyTorch); output NCHW (N, num_class, *seg_size)."""
    n = feats_nchw[0].shape[0]
    h1, w1 = feats_nchw[0].shape[2], feats_nchw[0].shape[3]

    decodes = []
    for idx, f in enumerate(feats_nchw, 1):
        x = jnp.transpose(f, (0, 2, 3, 1))                      # NCHW -> NHWC
        if MATMUL_DTYPE != jnp.float32:
            x = x.astype(MATMUL_DTYPE)      # halves proj-kernel read traffic
        nb, hh, ww, cc = x.shape
        p = params[f'proj{idx}']
        y = ln_linear_gelu(x.reshape(nb * hh * ww, cc),
                           p['gamma'], p['beta'], p['w'], p['b'])
        decodes.append(y.reshape(nb, hh, ww, y.shape[-1]))      # lane-padded E

    e_pad = decodes[0].shape[-1]
    # Resize levels 2..4 to level-1 resolution (padded lanes stay exactly 0);
    # the (N,H1,W1,4E) concat is formed virtually inside the fusion kernel.
    parts = [decodes[0]] + [_bilinear_resize_nhwc(d, (h1, w1))
                            for d in decodes[1:]]
    parts2d = [p.reshape(n * h1 * w1, e_pad) for p in parts]

    pf, pc = params['fusion'], params['conv_last']
    fuse_softmax = (seg_size[0] == h1 and seg_size[1] == w1)
    softmax_mode = (('softmax' if use_softmax else 'log')
                    if fuse_softmax else None)
    head = fusion_head(parts2d, pf['gamma'], pf['beta'], pf['w'], pf['b'],
                       pc['w'], pc['b'], embed_dim=embed_dim,
                       num_class=num_class, softmax_mode=softmax_mode)

    if fuse_softmax:
        out = head.reshape(n, h1, w1, -1)[..., :num_class]
    else:
        # SSformerSSHead: drop the class-lane padding *before* the segSize
        # resize (the dominant HBM traffic), resize bf16, then (log_)softmax.
        logits = head[:, :num_class].reshape(n, h1, w1, num_class)
        logits = _bilinear_resize_nhwc(logits, seg_size)
        sh, sw = seg_size
        sm = channel_softmax(logits.reshape(n * sh * sw, num_class),
                             num_class, use_softmax)
        out = sm.reshape(n, sh, sw, num_class)
    return jnp.transpose(out, (0, 3, 1, 2))                     # NHWC -> NCHW


# ----------------------------------------------------------------------------
# pure-JAX f32 reference (for correctness check)
# ----------------------------------------------------------------------------
def reference_forward(params, feats_nchw, seg_size, embed_dim, num_class,
                      use_softmax=False):
    def ln_lin_gelu(x, p):
        mu = jnp.mean(x, -1, keepdims=True)
        var = jnp.mean((x - mu) ** 2, -1, keepdims=True)
        xn = (x - mu) / jnp.sqrt(var + _EPS) * p['gamma'] + p['beta']
        return jax.nn.gelu(xn @ p['w'] + p['b'], approximate=False)

    decodes = [ln_lin_gelu(jnp.transpose(f, (0, 2, 3, 1)), params[f'proj{i}'])
               for i, f in enumerate(feats_nchw, 1)]
    h1, w1 = decodes[0].shape[1:3]
    fused = [decodes[0]] + [_bilinear_resize_nhwc(d, (h1, w1))
                            for d in decodes[1:]]
    fused = jnp.concatenate(fused, -1)
    fo = ln_lin_gelu(fused, params['fusion'])
    logits = fo @ params['conv_last']['w'] + params['conv_last']['b']
    logits = _bilinear_resize_nhwc(logits, seg_size)
    out = (jax.nn.softmax(logits, -1) if use_softmax
           else jax.nn.log_softmax(logits, -1))
    return jnp.transpose(out, (0, 3, 1, 2))


# ----------------------------------------------------------------------------
if __name__ == "__main__":
    key = jax.random.PRNGKey(0)
    N, E = 2, 32
    H1 = W1 = 8
    NUM_CLASS = 19

    ks = jax.random.split(key, 5)
    feats = [
        jax.random.normal(ks[0], (N, E,     H1,      W1),      jnp.float32),
        jax.random.normal(ks[1], (N, 2 * E, H1 // 2, W1 // 2), jnp.float32),
        jax.random.normal(ks[2], (N, 4 * E, H1 // 4, W1 // 4), jnp.float32),
        jax.random.normal(ks[3], (N, 8 * E, H1 // 8, W1 // 8), jnp.float32),
    ]
    params = init_params(ks[4], E, NUM_CLASS)

    # bf16 inputs/operands/slabs + approx erf/reciprocal bound the error.
    TOL = 5e-3 if MATMUL_DTYPE == jnp.float32 else 7.5e-2

    # Config A: segSize != decode resolution -> resize + standalone softmax
    SEG_A = (16, 16)
    outA = ssformer_decoder_forward(params, feats, SEG_A, E, NUM_CLASS,
                                    use_softmax=False)
    outA = jax.block_until_ready(outA)
    assert outA.shape == (N, NUM_CLASS, SEG_A[0], SEG_A[1]), outA.shape
    refA = reference_forward(params, feats, SEG_A, E, NUM_CLASS,
                             use_softmax=False)
    errA = float(jnp.max(jnp.abs(outA.astype(jnp.float32) - refA)))
    assert errA < TOL, f"config A max abs err {errA}"

    # Config B: segSize == decode resolution -> softmax fused into head kernel
    SEG_B = (H1, W1)
    outB = ssformer_decoder_forward(params, feats, SEG_B, E, NUM_CLASS,
                                    use_softmax=True)
    outB = jax.block_until_ready(outB)
    assert outB.shape == (N, NUM_CLASS, SEG_B[0], SEG_B[1]), outB.shape
    refB = reference_forward(params, feats, SEG_B, E, NUM_CLASS,
                             use_softmax=True)
    errB = float(jnp.max(jnp.abs(outB.astype(jnp.float32) - refB)))
    assert errB < TOL, f"config B max abs err {errB}"

    print("KERNEL_OK")
</pallas_src>

<mosaic_0001>
module attributes {stable_mosaic.version = 11 : i64} {
  func.func @_proj_kernel(%arg0: i32, %arg1: memref<64x32xbf16, #tpu.memory_space<vmem>>, %arg2: memref<1x32xf32, #tpu.memory_space<vmem>>, %arg3: memref<1x32xf32, #tpu.memory_space<vmem>>, %arg4: memref<32x128xbf16, #tpu.memory_space<vmem>>, %arg5: memref<1x128xf32, #tpu.memory_space<vmem>>, %arg6: memref<64x128xbf16, #tpu.memory_space<vmem>>) attributes {dimension_semantics = [#tpu.dimension_semantics<parallel>], iteration_bounds = array<i64: 2>, scalar_prefetch = 0 : i64, scratch_operands = 0 : i64, tpu.core_type = #tpu.core_type<tc>, window_params = [{transform_indices = @transform_0, window_bounds = array<i64: 64, 32>}, {pipeline_mode = #tpu.pipeline_mode<synchronous>, transform_indices = @transform_1, window_bounds = array<i64: 1, 32>}, {pipeline_mode = #tpu.pipeline_mode<synchronous>, transform_indices = @transform_2, window_bounds = array<i64: 1, 32>}, {pipeline_mode = #tpu.pipeline_mode<synchronous>, transform_indices = @transform_3, window_bounds = array<i64: 32, 128>}, {pipeline_mode = #tpu.pipeline_mode<synchronous>, transform_indices = @transform_4, window_bounds = array<i64: 1, 128>}, {transform_indices = @transform_5, window_bounds = array<i64: 64, 128>}]} {
    %c0 = arith.constant 0 : index
    %c0_0 = arith.constant 0 : index
    %0 = vector.load %arg1[%c0, %c0_0] : memref<64x32xbf16, #tpu.memory_space<vmem>>, vector<64x32xbf16>
    %1 = arith.extf %0 : vector<64x32xbf16> to vector<64x32xf32>
    %c0_1 = arith.constant 0 : index
    %c0_2 = arith.constant 0 : index
    %2 = vector.load %arg2[%c0_1, %c0_2] : memref<1x32xf32, #tpu.memory_space<vmem>>, vector<1x32xf32>
    %c0_3 = arith.constant 0 : index
    %c0_4 = arith.constant 0 : index
    %3 = vector.load %arg3[%c0_3, %c0_4] : memref<1x32xf32, #tpu.memory_space<vmem>>, vector<1x32xf32>
    %cst = arith.constant dense<0.000000e+00> : vector<64xf32>
    %4 = vector.multi_reduction <add>, %1, %cst [1] : vector<64x32xf32> to vector<64xf32>
    %5 = vector.shape_cast %4 : vector<64xf32> to vector<64x1xf32>
    %6 = arith.mulf %1, %1 : vector<64x32xf32>
    %cst_5 = arith.constant dense<0.000000e+00> : vector<64xf32>
    %7 = vector.multi_reduction <add>, %6, %cst_5 [1] : vector<64x32xf32> to vector<64xf32>
    %8 = vector.shape_cast %7 : vector<64xf32> to vector<64x1xf32>
    %cst_6 = arith.constant 3.125000e-02 : f32
    %9 = vector.broadcast %cst_6 : f32 to vector<64x1xf32>
    %10 = arith.mulf %5, %9 : vector<64x1xf32>
    %cst_7 = arith.constant 3.125000e-02 : f32
    %11 = vector.broadcast %cst_7 : f32 to vector<64x1xf32>
    %12 = arith.mulf %8, %11 : vector<64x1xf32>
    %13 = arith.mulf %10, %10 : vector<64x1xf32>
    %14 = arith.subf %12, %13 : vector<64x1xf32>
    %cst_8 = arith.constant 0.000000e+00 : f32
    %15 = vector.broadcast %cst_8 : f32 to vector<64x1xf32>
    %16 = arith.maximumf %14, %15 : vector<64x1xf32>
    %17 = vector.broadcast %10 : vector<64x1xf32> to vector<64x32xf32>
    %18 = arith.subf %1, %17 : vector<64x32xf32>
    %cst_9 = arith.constant 9.99999974E-6 : f32
    %19 = vector.broadcast %cst_9 : f32 to vector<64x1xf32>
    %20 = arith.addf %16, %19 : vector<64x1xf32>
    %21 = math.rsqrt %20 : vector<64x1xf32>
    %22 = vector.broadcast %21 : vector<64x1xf32> to vector<64x32xf32>
    %23 = arith.mulf %18, %22 : vector<64x32xf32>
    %24 = vector.broadcast %2 : vector<1x32xf32> to vector<64x32xf32>
    %25 = arith.mulf %23, %24 : vector<64x32xf32>
    %26 = vector.broadcast %3 : vector<1x32xf32> to vector<64x32xf32>
    %27 = arith.addf %25, %26 : vector<64x32xf32>
    %28 = arith.truncf %27 : vector<64x32xf32> to vector<64x32xbf16>
    %c0_10 = arith.constant 0 : index
    %c0_11 = arith.constant 0 : index
    %29 = vector.load %arg4[%c0_10, %c0_11] : memref<32x128xbf16, #tpu.memory_space<vmem>>, vector<32x128xbf16>
    %cst_12 = arith.constant dense<0.000000e+00> : vector<64x128xf32>
    %30 = tpu.matmul %28, %29, %cst_12 {dimension_numbers = #tpu.dot_dimension_numbers<[1], [0], [0], [1], [0, 0, 1, 1], [], []>} : vector<64x32xbf16>, vector<32x128xbf16>, vector<64x128xf32> -> vector<64x128xf32>
    %c0_13 = arith.constant 0 : index
    %c0_14 = arith.constant 0 : index
    %31 = vector.load %arg5[%c0_13, %c0_14] : memref<1x128xf32, #tpu.memory_space<vmem>>, vector<1x128xf32>
    %32 = vector.broadcast %31 : vector<1x128xf32> to vector<64x128xf32>
    %33 = arith.addf %30, %32 : vector<64x128xf32>
    %cst_15 = arith.constant 5.000000e-01 : f32
    %34 = vector.broadcast %cst_15 : f32 to vector<64x128xf32>
    %35 = arith.mulf %34, %33 : vector<64x128xf32>
    %cst_16 = arith.constant 0.707106769 : f32
    %36 = vector.broadcast %cst_16 : f32 to vector<64x128xf32>
    %37 = arith.mulf %33, %36 : vector<64x128xf32>
    %cst_17 = arith.constant 0.000000e+00 : f32
    %38 = vector.broadcast %cst_17 : f32 to vector<64x128xf32>
    %39 = arith.cmpf oge, %37, %38 : vector<64x128xf32>
    %cst_18 = arith.constant 1.000000e+00 : f32
    %cst_19 = arith.constant -1.000000e+00 : f32
    %40 = vector.broadcast %cst_18 : f32 to vector<64x128xf32>
    %41 = vector.broadcast %cst_19 : f32 to vector<64x128xf32>
    %42 = arith.select %39, %40, %41 : vector<64x128xi1>, vector<64x128xf32>
    %43 = math.absf %37 : vector<64x128xf32>
    %cst_20 = arith.constant 0.327591091 : f32
    %44 = vector.broadcast %cst_20 : f32 to vector<64x128xf32>
    %45 = arith.mulf %44, %43 : vector<64x128xf32>
    %cst_21 = arith.constant 1.000000e+00 : f32
    %46 = vector.broadcast %cst_21 : f32 to vector<64x128xf32>
    %47 = arith.addf %46, %45 : vector<64x128xf32>
    %48 = tpu.reciprocal %47 {approx = true} : vector<64x128xf32> -> vector<64x128xf32>
    %cst_22 = arith.constant 1.06140542 : f32
    %49 = vector.broadcast %cst_22 : f32 to vector<64x128xf32>
    %50 = arith.mulf %49, %48 : vector<64x128xf32>
    %cst_23 = arith.constant -1.45315206 : f32
    %51 = vector.broadcast %cst_23 : f32 to vector<64x128xf32>
    %52 = arith.addf %50, %51 : vector<64x128xf32>
    %53 = arith.mulf %52, %48 : vector<64x128xf32>
    %cst_24 = arith.constant 1.42141378 : f32
    %54 = vector.broadcast %cst_24 : f32 to vector<64x128xf32>
    %55 = arith.addf %53, %54 : vector<64x128xf32>
    %56 = arith.mulf %55, %48 : vector<64x128xf32>
    %cst_25 = arith.constant -0.284496725 : f32
    %57 = vector.broadcast %cst_25 : f32 to vector<64x128xf32>
    %58 = arith.addf %56, %57 : vector<64x128xf32>
    %59 = arith.mulf %58, %48 : vector<64x128xf32>
    %cst_26 = arith.constant 0.254829586 : f32
    %60 = vector.broadcast %cst_26 : f32 to vector<64x128xf32>
    %61 = arith.addf %59, %60 : vector<64x128xf32>
    %62 = arith.mulf %61, %48 : vector<64x128xf32>
    %cst_27 = arith.constant 0.000000e+00 : f32
    %63 = vector.broadcast %cst_27 : f32 to vector<64x128xf32>
    %64 = arith.subf %63, %43 : vector<64x128xf32>
    %65 = arith.mulf %64, %43 : vector<64x128xf32>
    %66 = math.exp %65 : vector<64x128xf32>
    %67 = arith.mulf %62, %66 : vector<64x128xf32>
    %cst_28 = arith.constant 1.000000e+00 : f32
    %68 = vector.broadcast %cst_28 : f32 to vector<64x128xf32>
    %69 = arith.subf %68, %67 : vector<64x128xf32>
    %70 = arith.mulf %42, %69 : vector<64x128xf32>
    %cst_29 = arith.constant 1.000000e+00 : f32
    %71 = vector.broadcast %cst_29 : f32 to vector<64x128xf32>
    %72 = arith.addf %71, %70 : vector<64x128xf32>
    %73 = arith.mulf %35, %72 : vector<64x128xf32>
    %74 = arith.truncf %73 : vector<64x128xf32> to vector<64x128xbf16>
    %c0_30 = arith.constant 0 : index
    %c0_31 = arith.constant 0 : index
    %75 = vector.load %arg6[%c0_30, %c0_31] : memref<64x128xbf16, #tpu.memory_space<vmem>>, vector<64x128xbf16>
    tpu.vector_store %arg6[%c0_30, %c0_31], %74 {strides = array<i32>} : memref<64x128xbf16, #tpu.memory_space<vmem>>, vector<64x128xbf16>,
    return
  }
  func.func @transform_0(%arg0: i32) -> (i32, i32) {
    %c0_i32 = arith.constant 0 : i32
    %c0_i32_0 = arith.constant 0 : i32
    return %arg0, %c0_i32 : i32, i32
  }
  func.func @transform_1(%arg0: i32) -> (i32, i32) {
    %c0_i32 = arith.constant 0 : i32
    %c0_i32_0 = arith.constant 0 : i32
    %c0_i32_1 = arith.constant 0 : i32
    return %c0_i32, %c0_i32_0 : i32, i32
  }
  func.func @transform_2(%arg0: i32) -> (i32, i32) {
    %c0_i32 = arith.constant 0 : i32
    %c0_i32_0 = arith.constant 0 : i32
    %c0_i32_1 = arith.constant 0 : i32
    return %c0_i32, %c0_i32_0 : i32, i32
  }
  func.func @transform_3(%arg0: i32) -> (i32, i32) {
    %c0_i32 = arith.constant 0 : i32
    %c0_i32_0 = arith.constant 0 : i32
    %c0_i32_1 = arith.constant 0 : i32
    return %c0_i32, %c0_i32_0 : i32, i32
  }
  func.func @transform_4(%arg0: i32) -> (i32, i32) {
    %c0_i32 = arith.constant 0 : i32
    %c0_i32_0 = arith.constant 0 : i32
    %c0_i32_1 = arith.constant 0 : i32
    return %c0_i32, %c0_i32_0 : i32, i32
  }
  func.func @transform_5(%arg0: i32) -> (i32, i32) {
    %c0_i32 = arith.constant 0 : i32
    %c0_i32_0 = arith.constant 0 : i32
    return %arg0, %c0_i32 : i32, i32
  }
}

</mosaic_0001>

<llo_original>
// kernel: tpu_custom_call.1
$region0: #{tpu_custom_call.1}
  #allocation0 [shape = 'u32[]', space=smem, size = 0x4, offset = 0x4, fixed_abs, tag = 'smem constant byte address 0x4 - core index']
  #allocation1 [shape = 'u32[144,128]{1,0:T(1,128)}', space=vmem, size = 0x12000, scoped, tag = 'internal scratch']
  %s0 = inlined_call_operand.vmem [shape: bf16[128,32], index: 0, kind: input, shape index: {}]
  %s1 = inlined_call_operand.vmem [shape: f32[1,32], index: 1, kind: input, shape index: {}]
  %s2 = inlined_call_operand.vmem [shape: f32[1,32], index: 2, kind: input, shape index: {}]
  %s3 = inlined_call_operand.vmem [shape: bf16[32,128], index: 3, kind: input, shape index: {}]
  %s4 = inlined_call_operand.vmem [shape: f32[1,128], index: 4, kind: input, shape index: {}]
  %s5 = inlined_call_operand.hbm [shape: bf16[128,128], index: 5, kind: output, shape index: {}]
  %s6 = sld [smem:[#allocation0]]
  $region53: #{tpu_custom_call.1} parent=0
    _
  %s8 = ssub.s32 1, %s6
  %s9 = scalar_select 0, %s8, %s6
  $region1: #{tpu_custom_call.1} parent=0
    #allocation2 [shape = 'u8[32768]{0}', space=vmem, size = 0x8000, scoped, tag = 'output window, operand 0']
    #allocation3 [shape = 's32[2]{0}', space=sflag, size = 0x8, scoped, tag = 'scoped memory for tpu_custom_call.1']
    %10 = vsyncpa [#allocation3], 0
    %s11 = scalar_lea.sflag [#allocation3], 1
    %12 = vsyncpa %s11, 0
    loop: start=0, step=1, limit=4
    $region2: #{tpu_custom_call.1} parent=1 // loop_pre_header
      _
    $region3: #{tpu_custom_call.1} parent=1 // loop_header
      %s14 = sphi 0, %s18
      %p15 = scmp.ge.s32.totalorder %s14, 4
      %s24 = sphi 0, %s26
      %s27 = sphi 0, %s24
      %s28 = sphi 0, %s27
      %s44 = sphi 0, %s28
      %s48 = sphi 0, %s48
      %s50 = sphi 0, %s48
      %s51 = sphi 0, %s50
      %s65 = sphi 0, %s51
      %s69 = sphi 0, %s69
      %s71 = sphi 0, %s69
      %s72 = sphi 0, %s71
      %s86 = sphi 0, %s72
      %s90 = sphi 0, %s90
      %s92 = sphi 0, %s90
      %s93 = sphi 0, %s92
      %s107 = sphi 0, %s93
      %s111 = sphi 0, %s111
      %s113 = sphi 0, %s111
      %s114 = sphi 0, %s113
      %s128 = sphi 0, %s114
      %s134 = sphi 0, %s136
      %s137 = sphi 0, %s134
      %s138 = sphi 0, %s137
      %s154 = sphi 0, %s138
    $region4: #{tpu_custom_call.1} parent=1 // loop_header_branch
      %17 = sbr.rel (%p15) target = $region8
    $region5: #{tpu_custom_call.1} parent=1 // loop_body
      %s19 = ssub.s32 %s14, 1
      %s20 = ssub.s32 %s14, 2
      %s21 = sadd.s32 %s14, 1
      %s22 = ssub.s32 %s14, %s21
      %p23 = scmp.eq.s32.totalorder %s22, 0
      %s25 = sadd.s32 %s24, 1
      %s26 = scalar_select %p23, %s24, %s25
      %p29 = pneg %p23
      %p30 = scmp.eq.s32.totalorder %s14, 1
      %p31 = por %p29, %p30
      %p32 = scmp.ne.s32.totalorder %s24, %s27
      %p33 = scmp.eq.s32.totalorder %s14, 0
      %p34 = por %p32, %p33
      %p35 = scmp.ne.s32.totalorder %s24, %s27
      %p36 = scmp.eq.s32.totalorder %s19, 1
      %p37 = por %p35, %p36
      %p38 = scmp.ne.s32.totalorder %s27, %s28
      %p39 = scmp.eq.s32.totalorder %s19, 0
      %p40 = por %p38, %p39
      %p41 = scmp.ne.s32.totalorder %s27, %s28
      %p42 = scmp.eq.s32.totalorder %s20, 1
      %p43 = por %p41, %p42
      %p45 = scmp.ne.s32.totalorder %s28, %s44
      %p46 = scmp.eq.s32.totalorder %s20, 0
      %p47 = por %p45, %p46
      %s49 = sadd.s32 %s48, 1
      %p52 = scmp.eq.s32.totalorder %s14, 1
      %p53 = scmp.ne.s32.totalorder %s48, %s50
      %p54 = scmp.eq.s32.totalorder %s14, 0
      %p55 = por %p53, %p54
      %p56 = scmp.ne.s32.totalorder %s48, %s50
      %p57 = scmp.eq.s32.totalorder %s19, 1
      %p58 = por %p56, %p57
      %p59 = scmp.ne.s32.totalorder %s50, %s51
      %p60 = scmp.eq.s32.totalorder %s19, 0
      %p61 = por %p59, %p60
      %p62 = scmp.ne.s32.totalorder %s50, %s51
      %p63 = scmp.eq.s32.totalorder %s20, 1
      %p64 = por %p62, %p63
      %p66 = scmp.ne.s32.totalorder %s51, %s65
      %p67 = scmp.eq.s32.totalorder %s20, 0
      %p68 = por %p66, %p67
      %s70 = sadd.s32 %s69, 1
      %p73 = scmp.eq.s32.totalorder %s14, 1
      %p74 = scmp.ne.s32.totalorder %s69, %s71
      %p75 = scmp.eq.s32.totalorder %s14, 0
      %p76 = por %p74, %p75
      %p77 = scmp.ne.s32.totalorder %s69, %s71
      %p78 = scmp.eq.s32.totalorder %s19, 1
      %p79 = por %p77, %p78
      %p80 = scmp.ne.s32.totalorder %s71, %s72
      %p81 = scmp.eq.s32.totalorder %s19, 0
      %p82 = por %p80, %p81
      %p83 = scmp.ne.s32.totalorder %s71, %s72
      %p84 = scmp.eq.s32.totalorder %s20, 1
      %p85 = por %p83, %p84
      %p87 = scmp.ne.s32.totalorder %s72, %s86
      %p88 = scmp.eq.s32.totalorder %s20, 0
      %p89 = por %p87, %p88
      %s91 = sadd.s32 %s90, 1
      %p94 = scmp.eq.s32.totalorder %s14, 1
      %p95 = scmp.ne.s32.totalorder %s90, %s92
      %p96 = scmp.eq.s32.totalorder %s14, 0
      %p97 = por %p95, %p96
      %p98 = scmp.ne.s32.totalorder %s90, %s92
      %p99 = scmp.eq.s32.totalorder %s19, 1
      %p100 = por %p98, %p99
      %p101 = scmp.ne.s32.totalorder %s92, %s93
      %p102 = scmp.eq.s32.totalorder %s19, 0
      %p103 = por %p101, %p102
      %p104 = scmp.ne.s32.totalorder %s92, %s93
      %p105 = scmp.eq.s32.totalorder %s20, 1
      %p106 = por %p104, %p105
      %p108 = scmp.ne.s32.totalorder %s93, %s107
      %p109 = scmp.eq.s32.totalorder %s20, 0
      %p110 = por %p108, %p109
      %s112 = sadd.s32 %s111, 1
      %p115 = scmp.eq.s32.totalorder %s14, 1
      %p116 = scmp.ne.s32.totalorder %s111, %s113
      %p117 = scmp.eq.s32.totalorder %s14, 0
      %p118 = por %p116, %p117
      %p119 = scmp.ne.s32.totalorder %s111, %s113
      %p120 = scmp.eq.s32.totalorder %s19, 1
      %p121 = por %p119, %p120
      %p122 = scmp.ne.s32.totalorder %s113, %s114
      %p123 = scmp.eq.s32.totalorder %s19, 0
      %p124 = por %p122, %p123
      %p125 = scmp.ne.s32.totalorder %s113, %s114
      %p126 = scmp.eq.s32.totalorder %s20, 1
      %p127 = por %p125, %p126
      %p129 = scmp.ne.s32.totalorder %s114, %s128
      %p130 = scmp.eq.s32.totalorder %s20, 0
      %p131 = por %p129, %p130
      %s132 = ssub.s32 %s14, %s21
      %p133 = scmp.eq.s32.totalorder %s132, 0
      %s135 = sadd.s32 %s134, 1
      %s136 = scalar_select %p133, %s134, %s135
      %p139 = pneg %p133
      %p140 = scmp.eq.s32.totalorder %s14, 1
      %p141 = por %p139, %p140
      %p142 = scmp.ne.s32.totalorder %s134, %s137
      %p143 = scmp.eq.s32.totalorder %s14, 0
      %p144 = por %p142, %p143
      %p145 = scmp.ne.s32.totalorder %s134, %s137
      %p146 = scmp.eq.s32.totalorder %s19, 1
      %p147 = por %p145, %p146
      %p148 = scmp.ne.s32.totalorder %s137, %s138
      %p149 = scmp.eq.s32.totalorder %s19, 0
      %p150 = por %p148, %p149
      %p151 = scmp.ne.s32.totalorder %s137, %s138
      %p152 = scmp.eq.s32.totalorder %s20, 1
      %p153 = por %p151, %p152
      %p155 = scmp.ne.s32.totalorder %s138, %s154
      %p156 = scmp.eq.s32.totalorder %s20, 0
      %p157 = por %p155, %p156
      %p158 = scmp.le.s32.totalorder 1, %s14
      %p159 = scmp.lt.s32.totalorder %s14, 3
      %p160 = pnand %p158, %p159
      %p161 = pneg %p160
      // Predicated region
      $region9: #{tpu_custom_call.1} parent=5 // pred_check
        _
      $region10: #{tpu_custom_call.1} parent=5 // pred_check_branch
        %163 = sbr.rel (%p160) target = $region12
      $region11: #{tpu_custom_call.1} parent=5 // pred_region
        %s164 = ssub.s32 %s14, 1
        // Predicated region
        $region13: #{tpu_custom_call.1} parent=11 // pred_check
          %p165 = pneg %p61
        $region14: #{tpu_custom_call.1} parent=11 // pred_check_branch
          %167 = sbr.rel (%p165) target = $region16
        $region15: #{tpu_custom_call.1} parent=11 // pred_region
          _
        $region16: #{tpu_custom_call.1} parent=11 // pred_fallthru
          _
        // Predicated region
        $region17: #{tpu_custom_call.1} parent=11 // pred_check
          %p168 = pneg %p82
        $region18: #{tpu_custom_call.1} parent=11 // pred_check_branch
          %170 = sbr.rel (%p168) target = $region20
        $region19: #{tpu_custom_call.1} parent=11 // pred_region
          _
        $region20: #{tpu_custom_call.1} parent=11 // pred_fallthru
          _
        // Predicated region
        $region21: #{tpu_custom_call.1} parent=11 // pred_check
          %p171 = pneg %p103
        $region22: #{tpu_custom_call.1} parent=11 // pred_check_branch
          %173 = sbr.rel (%p171) target = $region24
        $region23: #{tpu_custom_call.1} parent=11 // pred_region
          _
        $region24: #{tpu_custom_call.1} parent=11 // pred_fallthru
          _
        // Predicated region
        $region25: #{tpu_custom_call.1} parent=11 // pred_check
          %p174 = pneg %p124
        $region26: #{tpu_custom_call.1} parent=11 // pred_check_branch
          %176 = sbr.rel (%p174) target = $region28
        $region27: #{tpu_custom_call.1} parent=11 // pred_region
          _
        $region28: #{tpu_custom_call.1} parent=11 // pred_fallthru
          _
      $region12: #{tpu_custom_call.1} parent=5 // pred_fallthru
        _
      %p177 = scmp.lt.s32.totalorder %s14, 2
      // Predicated region
      $region29: #{tpu_custom_call.1} parent=5 // pred_check
        %p178 = pneg %p177
      $region30: #{tpu_custom_call.1} parent=5 // pred_check_branch
        %180 = sbr.rel (%p178) target = $region32
      $region31: #{tpu_custom_call.1} parent=5 // pred_region
        // Predicated region
        $region33: #{tpu_custom_call.1} parent=31 // pred_check
          %p181 = pneg %p34
        $region34: #{tpu_custom_call.1} parent=31 // pred_check_branch
          %183 = sbr.rel (%p181) target = $region36
        $region35: #{tpu_custom_call.1} parent=31 // pred_region
          %s184 = smul.u32 8, %s14
          %p185 = scmp.lt.s32.totalorder %s184, 15
          %s186 = scalar_select %p185, %s184, 15
          %s187 = smul.addr %s186, 4
          %s188 = scalar_lea.vmem %s0, %s187
          %s189 = smul.u32 8, %s14
        $region36: #{tpu_custom_call.1} parent=31 // pred_fallthru
          _
      $region32: #{tpu_custom_call.1} parent=5 // pred_fallthru
        _
      %p190 = scmp.le.s32.totalorder 1, %s14
      %p191 = scmp.lt.s32.totalorder %s14, 3
      %p192 = pnand %p190, %p191
      %p193 = pneg %p192
      // Predicated region
      $region37: #{tpu_custom_call.1} parent=5 // pred_check
        _
      $region38: #{tpu_custom_call.1} parent=5 // pred_check_branch
        %195 = sbr.rel (%p192) target = $region40
      $region39: #{tpu_custom_call.1} parent=5 // pred_region
        %s196 = ssub.s32 %s14, 1
        %s197 = smul.u32 8, %s19
        %p198 = scmp.lt.s32.totalorder %s197, 15
        %s199 = scalar_select %p198, %s197, 15
        %s200 = smul.addr %s199, 4
        %s201 = scalar_lea.vmem %s0, %s200
        %p202 = pneg %p40
        %p203 = pneg %p37
        %p204 = pneg %p61
        %p205 = pneg %p58
        %p206 = pneg %p82
        %p207 = pneg %p79
        %p208 = pneg %p103
        %p209 = pneg %p100
        %p210 = pneg %p124
        %p211 = pneg %p121
        %p212 = pneg %p150
        %p213 = pneg %p147
        %s214 = sand.u32 %s137, 1
        %s215 = scalar_lea.sflag [#allocation3], %s214
        %s216 = sand.u32 %s137, 1
        %s217 = smul.addr %s216, 32
        %s218 = scalar_lea.vmem [#allocation2], %s217
        %s219 = smul.u32 8, %s19
        %p220 = scmp.lt.s32.totalorder %s219, 15
        %s221 = scalar_select %p220, %s219, 15
        %s222 = smul.addr %s221, 4
        %s223 = scalar_lea.vmem %s0, %s222
        %s224 = smul.u32 8, %s19
        %s225 = smul.u32 8, %s19
        %v227 = vld [vmem:[%s223] sm:$0xf]
        %v228 = vld [vmem:[%s223 + $0x4] sm:$0xf]
        %v229 = vld [vmem:[%s223 + $0x8] sm:$0xf]
        %v230 = vld [vmem:[%s223 + $0xc] sm:$0xf]
        %v231 = vld [vmem:[%s223 + $0x10] sm:$0xf]
        %v232 = vld [vmem:[%s223 + $0x14] sm:$0xf]
        %v233 = vld [vmem:[%s223 + $0x18] sm:$0xf]
        %v234 = vld [vmem:[%s223 + $0x1c] sm:$0xf]
        %v235 = vunpack.c.l.bf16 %v227
        %v236 = vunpack.c.l.bf16 %v228
        %v237 = vunpack.c.l.bf16 %v229
        %v238 = vunpack.c.l.bf16 %v230
        %v239 = vunpack.c.l.bf16 %v231
        %v240 = vunpack.c.l.bf16 %v232
        %v241 = vunpack.c.l.bf16 %v233
        %v242 = vunpack.c.l.bf16 %v234
        %v243 = vld [vmem:[%s1] sm:$0x1]
        %v244 = vld [vmem:[%s2] sm:$0x1]
        %vm245 = vcmask 261120
        %v246 = vsel %vm245, %v235, 0.0
        %247 = vadd.xlane.f32.xlu0 %v246
        %v248 = vpop.xlane.xlu0 %247
        %v249 = vsel %vm245, %v236, 0.0
        %250 = vadd.xlane.f32.xlu0 %v249
        %v251 = vpop.xlane.xlu0 %250
        %v252 = vsel %vm245, %v237, 0.0
        %253 = vadd.xlane.f32.xlu0 %v252
        %v254 = vpop.xlane.xlu0 %253
        %v255 = vsel %vm245, %v238, 0.0
        %256 = vadd.xlane.f32.xlu0 %v255
        %v257 = vpop.xlane.xlu0 %256
        %v258 = vsel %vm245, %v239, 0.0
        %259 = vadd.xlane.f32.xlu0 %v258
        %v260 = vpop.xlane.xlu0 %259
        %v261 = vsel %vm245, %v240, 0.0
        %262 = vadd.xlane.f32.xlu0 %v261
        %v263 = vpop.xlane.xlu0 %262
        %v264 = vsel %vm245, %v241, 0.0
        %265 = vadd.xlane.f32.xlu0 %v264
        %v266 = vpop.xlane.xlu0 %265
        %v267 = vsel %vm245, %v242, 0.0
        %268 = vadd.xlane.f32.xlu0 %v267
        %v269 = vpop.xlane.xlu0 %268
        %v270 = vmul.f32 %v235, %v235
        %v271 = vmul.f32 %v236, %v236
        %v272 = vmul.f32 %v237, %v237
        %v273 = vmul.f32 %v238, %v238
        %v274 = vmul.f32 %v239, %v239
        %v275 = vmul.f32 %v240, %v240
        %v276 = vmul.f32 %v241, %v241
        %v277 = vmul.f32 %v242, %v242
        %v278 = vsel %vm245, %v270, 0.0
        %279 = vadd.xlane.f32.xlu0 %v278
        %v280 = vpop.xlane.xlu0 %279
        %v281 = vsel %vm245, %v271, 0.0
        %282 = vadd.xlane.f32.xlu0 %v281
        %v283 = vpop.xlane.xlu0 %282
        %v284 = vsel %vm245, %v272, 0.0
        %285 = vadd.xlane.f32.xlu0 %v284
        %v286 = vpop.xlane.xlu0 %285
        %v287 = vsel %vm245, %v273, 0.0
        %288 = vadd.xlane.f32.xlu0 %v287
        %v289 = vpop.xlane.xlu0 %288
        %v290 = vsel %vm245, %v274, 0.0
        %291 = vadd.xlane.f32.xlu0 %v290
        %v292 = vpop.xlane.xlu0 %291
        %v293 = vsel %vm245, %v275, 0.0
        %294 = vadd.xlane.f32.xlu0 %v293
        %v295 = vpop.xlane.xlu0 %294
        %v296 = vsel %vm245, %v276, 0.0
        %297 = vadd.xlane.f32.xlu0 %v296
        %v298 = vpop.xlane.xlu0 %297
        %v299 = vsel %vm245, %v277, 0.0
        %300 = vadd.xlane.f32.xlu0 %v299
        %v301 = vpop.xlane.xlu0 %300
        %v302 = vmul.f32 %v248, 0.03125
        %v303 = vmul.f32 %v251, 0.03125
        %v304 = vmul.f32 %v254, 0.03125
        %v305 = vmul.f32 %v257, 0.03125
        %v306 = vmul.f32 %v260, 0.03125
        %v307 = vmul.f32 %v263, 0.03125
        %v308 = vmul.f32 %v266, 0.03125
        %v309 = vmul.f32 %v269, 0.03125
        %v310 = vmul.f32 %v280, 0.03125
        %v311 = vmul.f32 %v283, 0.03125
        %v312 = vmul.f32 %v286, 0.03125
        %v313 = vmul.f32 %v289, 0.03125
        %v314 = vmul.f32 %v292, 0.03125
        %v315 = vmul.f32 %v295, 0.03125
        %v316 = vmul.f32 %v298, 0.03125
        %v317 = vmul.f32 %v301, 0.03125
        %v318 = vmul.f32 %v302, %v302
        %v319 = vmul.f32 %v303, %v303
        %v320 = vmul.f32 %v304, %v304
        %v321 = vmul.f32 %v305, %v305
        %v322 = vmul.f32 %v306, %v306
        %v323 = vmul.f32 %v307, %v307
        %v324 = vmul.f32 %v308, %v308
        %v325 = vmul.f32 %v309, %v309
        %v326 = vsub.f32 %v310, %v318
        %v327 = vsub.f32 %v311, %v319
        %v328 = vsub.f32 %v312, %v320
        %v329 = vsub.f32 %v313, %v321
        %v330 = vsub.f32 %v314, %v322
        %v331 = vsub.f32 %v315, %v323
        %v332 = vsub.f32 %v316, %v324
        %v333 = vsub.f32 %v317, %v325
        %v334 = vmax.f32 %v326, 0.0
        %v335 = vmax.f32 %v327, 0.0
        %v336 = vmax.f32 %v328, 0.0
        %v337 = vmax.f32 %v329, 0.0
        %v338 = vmax.f32 %v330, 0.0
        %v339 = vmax.f32 %v331, 0.0
        %v340 = vmax.f32 %v332, 0.0
        %v341 = vmax.f32 %v333, 0.0
        %v342 = vsub.f32 %v235, %v302
        %v343 = vsub.f32 %v236, %v303
        %v344 = vsub.f32 %v237, %v304
        %v345 = vsub.f32 %v238, %v305
        %v346 = vsub.f32 %v239, %v306
        %v347 = vsub.f32 %v240, %v307
        %v348 = vsub.f32 %v241, %v308
        %v349 = vsub.f32 %v242, %v309
        %v350 = vadd.f32 %v334, 1e-05
        %v351 = vadd.f32 %v335, 1e-05
        %v352 = vadd.f32 %v336, 1e-05
        %v353 = vadd.f32 %v337, 1e-05
        %v354 = vadd.f32 %v338, 1e-05
        %v355 = vadd.f32 %v339, 1e-05
        %v356 = vadd.f32 %v340, 1e-05
        %v357 = vadd.f32 %v341, 1e-05
        %v358 = vrsqrt.pop %v350
        %v359 = vrsqrt.pop %v351
        %v360 = vrsqrt.pop %v352
        %v361 = vrsqrt.pop %v353
        %v362 = vrsqrt.pop %v354
        %v363 = vrsqrt.pop %v355
        %v364 = vrsqrt.pop %v356
        %v365 = vrsqrt.pop %v357
        %v366 = vmul.f32 %v342, %v358
        %v367 = vmul.f32 %v343, %v359
        %v368 = vmul.f32 %v344, %v360
        %v369 = vmul.f32 %v345, %v361
        %v370 = vmul.f32 %v346, %v362
        %v371 = vmul.f32 %v347, %v363
        %v372 = vmul.f32 %v348, %v364
        %v373 = vmul.f32 %v349, %v365
        %v375 = vlaneseq
        %v376 = vshrl.u32 %v375, 7
        %v377 = vsub.s32 0, %v376
        %v378 = vrot.slane %v243, %v377
        %v380 = vmul.f32 %v366, %v378
        %v381 = vmul.f32 %v367, %v378
        %v382 = vmul.f32 %v368, %v378
        %v383 = vmul.f32 %v369, %v378
        %v384 = vmul.f32 %v370, %v378
        %v385 = vmul.f32 %v371, %v378
        %v386 = vmul.f32 %v372, %v378
        %v387 = vmul.f32 %v373, %v378
        %v389 = vlaneseq
        %v390 = vshrl.u32 %v389, 7
        %v391 = vsub.s32 0, %v390
        %v392 = vrot.slane %v244, %v391
        %v394 = vadd.f32 %v380, %v392
        %v395 = vadd.f32 %v381, %v392
        %v396 = vadd.f32 %v382, %v392
        %v397 = vadd.f32 %v383, %v392
        %v398 = vadd.f32 %v384, %v392
        %v399 = vadd.f32 %v385, %v392
        %v400 = vadd.f32 %v386, %v392
        %v401 = vadd.f32 %v387, %v392
        %v402 = vpack.c.bf16 %v395, %v394
        %v403 = vpack.c.bf16 %v397, %v396
        %v404 = vpack.c.bf16 %v399, %v398
        %v405 = vpack.c.bf16 %v401, %v400
        %v406 = vld [vmem:[%s3] sm:$0xf]
        %v407 = vld [vmem:[%s3 + $0x4] sm:$0xf]
        %v408 = vld [vmem:[%s3 + $0x8] sm:$0xf]
        %v409 = vld [vmem:[%s3 + $0xc] sm:$0xf]
        %v410 = vld [vmem:[%s4] sm:$0x1]
        %v412 = vlaneseq
        %v413 = vshrl.u32 %v412, 7
        %v414 = vsub.s32 0, %v413
        %v415 = vrot.slane %v410, %v414
        %v421 = vunpack.c.l.b16 %v406
        %v422 = vunpack.c.l.b16 %v407
        %v423 = vunpack.c.l.b16 %v408
        %v424 = vunpack.c.l.b16 %v409
        %v425 = vpack.c.b16 %v422, %v421
        %v426 = vpack.c.b16 %v424, %v423
        %v430 = vsel %vm245, %v402, 0
        %v433 = vsel %vm245, %v403, 0
        %v436 = vsel %vm245, %v404, 0
        %v439 = vsel %vm245, %v405, 0
        %441 = vmatprep.subr.bf16.mxu0 0
        %442 = vmatpush1.bf16.msra.mxu0 %v425
        %443 = vmatprep.subr.bf16.mxu0 0
        %444 = vmatpush1.bf16.msra.mxu0 %v426
        %445 = vmatprep.subr.bf16.mxu0 0
        %446 = vmatpush1.bf16.msra.mxu0 0
        %447 = vmatprep.subr.bf16.mxu0 0
        %448 = vmatpush1.bf16.msra.mxu0 0
        %449 = vmatprep.subr.bf16.mxu0 0
        %450 = vmatpush1.bf16.msra.mxu0 0
        %451 = vmatprep.subr.bf16.mxu0 0
        %452 = vmatpush1.bf16.msra.mxu0 0
        %453 = vmatprep.subr.bf16.mxu0 0
        %454 = vmatpush1.bf16.msra.mxu0 0
        %455 = vmatprep.subr.bf16.mxu0 0
        %456 = vmatpush1.bf16.msra.mxu0 0
        %457 = vmatprep.subr.bf16.mxu0 0
        %458 = vmatpush1.bf16.msra.mxu0 0
        %459 = vmatprep.subr.bf16.mxu0 0
        %460 = vmatpush1.bf16.msra.mxu0 0
        %461 = vmatprep.subr.bf16.mxu0 0
        %462 = vmatpush1.bf16.msra.mxu0 0
        %463 = vmatprep.subr.bf16.mxu0 0
        %464 = vmatpush1.bf16.msra.mxu0 0
        %465 = vmatprep.subr.bf16.mxu0 0
        %466 = vmatpush1.bf16.msra.mxu0 0
        %467 = vmatprep.subr.bf16.mxu0 0
        %468 = vmatpush1.bf16.msra.mxu0 0
        %469 = vmatprep.subr.bf16.mxu0 0
        %470 = vmatpush1.bf16.msra.mxu0 0
        %471 = vmatprep.subr.bf16.mxu0 0
        %472 = vmatpush1.bf16.msra.mxu0 0
        %473 = vmatprep.mubr.bf16.mxu0 0
        %474 = vmatmul.mubr.bf16.gmra.mrb[0].mxu0 %v430
        %v475 = vpop.f32.mrb[0].mxu0
        %v476 = vadd.f32 %v415, %v475
        %v477 = vpop.f32.mrb[0].mxu0
        %v478 = vpop.f32.mrb[0].mxu0
        %v479 = vadd.f32 %v415, %v478
        %v480 = vpop.f32.mrb[0].mxu0
        %481 = vmatprep.mubr.bf16.mxu0 0
        %482 = vmatmul.mubr.bf16.gmra.mrb[0].mxu0 %v433
        %v483 = vpop.f32.mrb[0].mxu0
        %v484 = vadd.f32 %v415, %v483
        %v485 = vpop.f32.mrb[0].mxu0
        %v486 = vpop.f32.mrb[0].mxu0
        %v487 = vadd.f32 %v415, %v486
        %v488 = vpop.f32.mrb[0].mxu0
        %489 = vmatprep.mubr.bf16.mxu0 0
        %490 = vmatmul.mubr.bf16.gmra.mrb[0].mxu0 %v436
        %v491 = vpop.f32.mrb[0].mxu0
        %v492 = vadd.f32 %v415, %v491
        %v493 = vpop.f32.mrb[0].mxu0
        %v494 = vpop.f32.mrb[0].mxu0
        %v495 = vadd.f32 %v415, %v494
        %v496 = vpop.f32.mrb[0].mxu0
        %497 = vmatprep.mubr.bf16.mxu0 0
        %498 = vmatmul.mubr.bf16.gmra.mrb[0].mxu0 %v439
        %v499 = vpop.f32.mrb[0].mxu0
        %v500 = vadd.f32 %v415, %v499
        %v501 = vpop.f32.mrb[0].mxu0
        %v502 = vpop.f32.mrb[0].mxu0
        %v503 = vadd.f32 %v415, %v502
        %v504 = vpop.f32.mrb[0].mxu0
        %505 = vdwg.mxu0
        %v506 = vmul.f32 %v476, 0.5
        %v507 = vmul.f32 %v479, 0.5
        %v508 = vmul.f32 %v484, 0.5
        %v509 = vmul.f32 %v487, 0.5
        %v510 = vmul.f32 %v492, 0.5
        %v511 = vmul.f32 %v495, 0.5
        %v512 = vmul.f32 %v500, 0.5
        %v513 = vmul.f32 %v503, 0.5
        %v514 = vmul.f32 %v476, 0.70710677
        %v515 = vmul.f32 %v479, 0.70710677
        %v516 = vmul.f32 %v484, 0.70710677
        %v517 = vmul.f32 %v487, 0.70710677
        %v518 = vmul.f32 %v492, 0.70710677
        %v519 = vmul.f32 %v495, 0.70710677
        %v520 = vmul.f32 %v500, 0.70710677
        %v521 = vmul.f32 %v503, 0.70710677
        %vm522 = vcmp.ge.f32.partialorder %v514, 0.0
        %vm523 = vcmp.ge.f32.partialorder %v515, 0.0
        %vm524 = vcmp.ge.f32.partialorder %v516, 0.0
        %vm525 = vcmp.ge.f32.partialorder %v517, 0.0
        %vm526 = vcmp.ge.f32.partialorder %v518, 0.0
        %vm527 = vcmp.ge.f32.partialorder %v519, 0.0
        %vm528 = vcmp.ge.f32.partialorder %v520, 0.0
        %vm529 = vcmp.ge.f32.partialorder %v521, 0.0
        %v530 = vsel %vm522, 1.0, -1.0
        %v531 = vsel %vm523, 1.0, -1.0
        %v532 = vsel %vm524, 1.0, -1.0
        %v533 = vsel %vm525, 1.0, -1.0
        %v534 = vsel %vm526, 1.0, -1.0
        %v535 = vsel %vm527, 1.0, -1.0
        %v536 = vsel %vm528, 1.0, -1.0
        %v537 = vsel %vm529, 1.0, -1.0
        %v538 = vand.u32 2147483647, %v514
        %v539 = vand.u32 2147483647, %v515
        %v540 = vand.u32 2147483647, %v516
        %v541 = vand.u32 2147483647, %v517
        %v542 = vand.u32 2147483647, %v518
        %v543 = vand.u32 2147483647, %v519
        %v544 = vand.u32 2147483647, %v520
        %v545 = vand.u32 2147483647, %v521
        %v546 = vmul.f32 %v538, 0.3275911
        %v547 = vmul.f32 %v539, 0.3275911
        %v548 = vmul.f32 %v540, 0.3275911
        %v549 = vmul.f32 %v541, 0.3275911
        %v550 = vmul.f32 %v542, 0.3275911
        %v551 = vmul.f32 %v543, 0.3275911
        %v552 = vmul.f32 %v544, 0.3275911
        %v553 = vmul.f32 %v545, 0.3275911
        %v554 = vadd.f32 %v546, 1.0
        %v555 = vadd.f32 %v547, 1.0
        %v556 = vadd.f32 %v548, 1.0
        %v557 = vadd.f32 %v549, 1.0
        %v558 = vadd.f32 %v550, 1.0
        %v559 = vadd.f32 %v551, 1.0
        %v560 = vadd.f32 %v552, 1.0
        %v561 = vadd.f32 %v553, 1.0
        %v562 = vrcp.pop %v554
        %v563 = vrcp.pop %v555
        %v564 = vrcp.pop %v556
        %v565 = vrcp.pop %v557
        %v566 = vrcp.pop %v558
        %v567 = vrcp.pop %v559
        %v568 = vrcp.pop %v560
        %v569 = vrcp.pop %v561
        %v570 = vmul.f32 %v562, 1.0614054
        %v571 = vmul.f32 %v563, 1.0614054
        %v572 = vmul.f32 %v564, 1.0614054
        %v573 = vmul.f32 %v565, 1.0614054
        %v574 = vmul.f32 %v566, 1.0614054
        %v575 = vmul.f32 %v567, 1.0614054
        %v576 = vmul.f32 %v568, 1.0614054
        %v577 = vmul.f32 %v569, 1.0614054
        %v578 = vadd.f32 %v570, -1.4531521
        %v579 = vadd.f32 %v571, -1.4531521
        %v580 = vadd.f32 %v572, -1.4531521
        %v581 = vadd.f32 %v573, -1.4531521
        %v582 = vadd.f32 %v574, -1.4531521
        %v583 = vadd.f32 %v575, -1.4531521
        %v584 = vadd.f32 %v576, -1.4531521
        %v585 = vadd.f32 %v577, -1.4531521
        %v586 = vmul.f32 %v578, %v562
        %v587 = vmul.f32 %v579, %v563
        %v588 = vmul.f32 %v580, %v564
        %v589 = vmul.f32 %v581, %v565
        %v590 = vmul.f32 %v582, %v566
        %v591 = vmul.f32 %v583, %v567
        %v592 = vmul.f32 %v584, %v568
        %v593 = vmul.f32 %v585, %v569
        %v594 = vadd.f32 %v586, 1.4214138
        %v595 = vadd.f32 %v587, 1.4214138
        %v596 = vadd.f32 %v588, 1.4214138
        %v597 = vadd.f32 %v589, 1.4214138
        %v598 = vadd.f32 %v590, 1.4214138
        %v599 = vadd.f32 %v591, 1.4214138
        %v600 = vadd.f32 %v592, 1.4214138
        %v601 = vadd.f32 %v593, 1.4214138
        %v602 = vmul.f32 %v594, %v562
        %v603 = vmul.f32 %v595, %v563
        %v604 = vmul.f32 %v596, %v564
        %v605 = vmul.f32 %v597, %v565
        %v606 = vmul.f32 %v598, %v566
        %v607 = vmul.f32 %v599, %v567
        %v608 = vmul.f32 %v600, %v568
        %v609 = vmul.f32 %v601, %v569
        %v610 = vadd.f32 %v602, -0.28449672
        %v611 = vadd.f32 %v603, -0.28449672
        %v612 = vadd.f32 %v604, -0.28449672
        %v613 = vadd.f32 %v605, -0.28449672
        %v614 = vadd.f32 %v606, -0.28449672
        %v615 = vadd.f32 %v607, -0.28449672
        %v616 = vadd.f32 %v608, -0.28449672
        %v617 = vadd.f32 %v609, -0.28449672
        %v618 = vmul.f32 %v610, %v562
        %v619 = vmul.f32 %v611, %v563
        %v620 = vmul.f32 %v612, %v564
        %v621 = vmul.f32 %v613, %v565
        %v622 = vmul.f32 %v614, %v566
        %v623 = vmul.f32 %v615, %v567
        %v624 = vmul.f32 %v616, %v568
        %v625 = vmul.f32 %v617, %v569
        %v626 = vadd.f32 %v618, 0.2548296
        %v627 = vadd.f32 %v619, 0.2548296
        %v628 = vadd.f32 %v620, 0.2548296
        %v629 = vadd.f32 %v621, 0.2548296
        %v630 = vadd.f32 %v622, 0.2548296
        %v631 = vadd.f32 %v623, 0.2548296
        %v632 = vadd.f32 %v624, 0.2548296
        %v633 = vadd.f32 %v625, 0.2548296
        %v634 = vmul.f32 %v626, %v562
        %v635 = vmul.f32 %v627, %v563
        %v636 = vmul.f32 %v628, %v564
        %v637 = vmul.f32 %v629, %v565
        %v638 = vmul.f32 %v630, %v566
        %v639 = vmul.f32 %v631, %v567
        %v640 = vmul.f32 %v632, %v568
        %v641 = vmul.f32 %v633, %v569
        %v642 = vsub.f32 0.0, %v538
        %v643 = vsub.f32 0.0, %v539
        %v644 = vsub.f32 0.0, %v540
        %v645 = vsub.f32 0.0, %v541
        %v646 = vsub.f32 0.0, %v542
        %v647 = vsub.f32 0.0, %v543
        %v648 = vsub.f32 0.0, %v544
        %v649 = vsub.f32 0.0, %v545
        %v650 = vmul.f32 %v642, %v538
        %v651 = vmul.f32 %v643, %v539
        %v652 = vmul.f32 %v644, %v540
        %v653 = vmul.f32 %v645, %v541
        %v654 = vmul.f32 %v646, %v542
        %v655 = vmul.f32 %v647, %v543
        %v656 = vmul.f32 %v648, %v544
        %v657 = vmul.f32 %v649, %v545
        %v658 = vmul.f32 %v650, 1.442695
        %v659 = vpow.pop %v658
        %v660 = vmul.f32 %v651, 1.442695
        %v661 = vpow.pop %v660
        %v662 = vmul.f32 %v652, 1.442695
        %v663 = vpow.pop %v662
        %v664 = vmul.f32 %v653, 1.442695
        %v665 = vpow.pop %v664
        %v666 = vmul.f32 %v654, 1.442695
        %v667 = vpow.pop %v666
        %v668 = vmul.f32 %v655, 1.442695
        %v669 = vpow.pop %v668
        %v670 = vmul.f32 %v656, 1.442695
        %v671 = vpow.pop %v670
        %v672 = vmul.f32 %v657, 1.442695
        %v673 = vpow.pop %v672
        %v674 = vmul.f32 %v634, %v659
        %v675 = vmul.f32 %v635, %v661
        %v676 = vmul.f32 %v636, %v663
        %v677 = vmul.f32 %v637, %v665
        %v678 = vmul.f32 %v638, %v667
        %v679 = vmul.f32 %v639, %v669
        %v680 = vmul.f32 %v640, %v671
        %v681 = vmul.f32 %v641, %v673
        %v682 = vsub.f32 1.0, %v674
        %v683 = vsub.f32 1.0, %v675
        %v684 = vsub.f32 1.0, %v676
        %v685 = vsub.f32 1.0, %v677
        %v686 = vsub.f32 1.0, %v678
        %v687 = vsub.f32 1.0, %v679
        %v688 = vsub.f32 1.0, %v680
        %v689 = vsub.f32 1.0, %v681
        %v690 = vmul.f32 %v530, %v682
        %v691 = vmul.f32 %v531, %v683
        %v692 = vmul.f32 %v532, %v684
        %v693 = vmul.f32 %v533, %v685
        %v694 = vmul.f32 %v534, %v686
        %v695 = vmul.f32 %v535, %v687
        %v696 = vmul.f32 %v536, %v688
        %v697 = vmul.f32 %v537, %v689
        %v698 = vadd.f32 %v690, 1.0
        %v699 = vadd.f32 %v691, 1.0
        %v700 = vadd.f32 %v692, 1.0
        %v701 = vadd.f32 %v693, 1.0
        %v702 = vadd.f32 %v694, 1.0
        %v703 = vadd.f32 %v695, 1.0
        %v704 = vadd.f32 %v696, 1.0
        %v705 = vadd.f32 %v697, 1.0
        %v706 = vmul.f32 %v506, %v698
        %v707 = vmul.f32 %v507, %v699
        %v708 = vmul.f32 %v508, %v700
        %v709 = vmul.f32 %v509, %v701
        %v710 = vmul.f32 %v510, %v702
        %v711 = vmul.f32 %v511, %v703
        %v712 = vmul.f32 %v512, %v704
        %v713 = vmul.f32 %v513, %v705
        %v714 = vpack.c.bf16 %v707, %v706
        %v715 = vpack.c.bf16 %v709, %v708
        %v716 = vpack.c.bf16 %v711, %v710
        %v717 = vpack.c.bf16 %v713, %v712
        %v722 = vunpack.c.l.b16 %v714
        %v723 = vunpack.c.h.b16 %v714
        %v724 = vunpack.c.l.b16 %v715
        %v725 = vunpack.c.h.b16 %v715
        %v726 = vunpack.c.l.b16 %v716
        %v727 = vunpack.c.h.b16 %v716
        %v728 = vunpack.c.l.b16 %v717
        %v729 = vunpack.c.h.b16 %v717
        %v730 = vpack.c.b16 %v722, %v722
        %v731 = vpack.c.b16 %v723, %v723
        %v732 = vpack.c.b16 %v724, %v724
        %v733 = vpack.c.b16 %v725, %v725
        %v734 = vpack.c.b16 %v726, %v726
        %v735 = vpack.c.b16 %v727, %v727
        %v736 = vpack.c.b16 %v728, %v728
        %v737 = vpack.c.b16 %v729, %v729
        %746 = vst [vmem:[%s218] sm:$0xf] %v730
        %747 = vst [vmem:[%s218 + $0x4] sm:$0xf] %v731
        %748 = vst [vmem:[%s218 + $0x8] sm:$0xf] %v732
        %749 = vst [vmem:[%s218 + $0xc] sm:$0xf] %v733
        %750 = vst [vmem:[%s218 + $0x10] sm:$0xf] %v734
        %751 = vst [vmem:[%s218 + $0x14] sm:$0xf] %v735
        %752 = vst [vmem:[%s218 + $0x18] sm:$0xf] %v736
        %753 = vst [vmem:[%s218 + $0x1c] sm:$0xf] %v737
        %s754 = sand.u32 %s137, 1
        %s755 = scalar_lea.sflag [#allocation3], %s754
        %s756 = sand.u32 %s137, 1
        %s757 = smul.addr %s756, 32
        %s758 = scalar_lea.vmem [#allocation2], %s757
        // Predicated region
        $region41: #{tpu_custom_call.1} parent=39 // pred_check
          %p759 = pneg %p147
        $region42: #{tpu_custom_call.1} parent=39 // pred_check_branch
          %761 = sbr.rel (%p759) target = $region44
        $region43: #{tpu_custom_call.1} parent=39 // pred_region
          %s762 = smul.u32 8, %s19
          %s764 = ssub.s32 512, 512
          %765 = vsyncadd %s755, %s764
          %s766 = smul.addr %s762, 64
          %s767 = scalar_lea.hbm %s5, %s766
          %s768 = sshll.u32 %s758, 4
          %s769 = int_to_ptr.vmem [resolvable:$true] %s768
          %774 = dma.vmem_to_hbm [thread:$0]  %s769, 512, %s767, %s755, 64, 64, 4
        $region44: #{tpu_custom_call.1} parent=39 // pred_fallthru
          _
      $region40: #{tpu_custom_call.1} parent=5 // pred_fallthru
        _
      %p775 = scmp.le.s32.totalorder 2, %s14
      // Predicated region
      $region45: #{tpu_custom_call.1} parent=5 // pred_check
        %p776 = pneg %p775
      $region46: #{tpu_custom_call.1} parent=5 // pred_check_branch
        %778 = sbr.rel (%p776) target = $region48
      $region47: #{tpu_custom_call.1} parent=5 // pred_region
        %s779 = ssub.s32 %s14, 2
        // Predicated region
        $region49: #{tpu_custom_call.1} parent=47 // pred_check
          %p780 = pneg %p153
        $region50: #{tpu_custom_call.1} parent=47 // pred_check_branch
          %782 = sbr.rel (%p780) target = $region52
        $region51: #{tpu_custom_call.1} parent=47 // pred_region
          %s783 = sand.u32 %s138, 1
          %s784 = scalar_lea.sflag [#allocation3], %s783
          %s785 = sand.u32 %s138, 1
          %s786 = smul.addr %s785, 32
          %s787 = scalar_lea.vmem [#allocation2], %s786
          %788 = dma.done %s784, 512
        $region52: #{tpu_custom_call.1} parent=47 // pred_fallthru
          _
      $region48: #{tpu_custom_call.1} parent=5 // pred_fallthru
        _
    $region6: #{tpu_custom_call.1} parent=1 // loop_footer
      %s18 = sadd.s32 1, %s14
    $region7: #{tpu_custom_call.1} parent=1 // loop_footer_branch
      %13 = sbr.rel target = $region3
    $region8: #{tpu_custom_call.1} parent=1 // loop_exit
      _
    %789 = vsyncpa [#allocation3], 1
    %s790 = scalar_lea.sflag [#allocation3], 1
    %791 = vsyncpa %s790, 1

</llo_original>
